<compile_context>
chip_gen: v5e
topology: v5e:2x2
jax: 0.10.0
libtpu: 0.0.40
codegen_flags: <defaults>
</compile_context>

<pallas_src>
import jax
import jax.numpy as jnp
from jax.experimental import pallas as pl
from jax.experimental.pallas import tpu as pltpu

F_IN = 107
F_HID = 32


def _cdiv(a, b):
    return -(-a // b)


def _round_up(n, m):
    return ((n + m - 1) // m) * m


def mlp_kernel(x_ref, w1_ref, b1_ref, w2_ref, b2_ref, o_ref):
    # fc1 on the MXU: x arrives as f32 (no wrapper-side cast copy); cast the tile
    # to bf16 in-kernel (cheap VPU work hidden under the DMA), accumulate in f32.
    xb = x_ref[...].astype(jnp.bfloat16)                       # (tb, 107)
    h = jnp.dot(xb, w1_ref[...], preferred_element_type=jnp.float32)
    h = jnp.maximum(h + b1_ref[...], 0.0)                      # (tb, 32) f32

    # fc3 (output width 1) as a q@k^T-style MXU matmul:
    #   (1, 32) . (tb, 32)^T -> (1, tb)
    # so the per-row outputs come out lane-dense (batch along lanes).  The sigmoid
    # epilogue, the stores and the writeback DMA then touch ~tb/128 dense vregs
    # instead of tb/8 one-valid-lane (tb, 1) vregs with masked stores.
    y = jax.lax.dot_general(
        w2_ref[...], h.astype(jnp.bfloat16),
        dimension_numbers=(((1,), (1,)), ((), ())),
        preferred_element_type=jnp.float32)                    # (1, tb) f32
    y = y + b2_ref[...]

    # sigmoid = 1 / (1 + exp(-y)): exp + approx reciprocal, both on the EUP slot.
    o_ref[...] = pl.reciprocal(1.0 + jnp.exp(-y), approx=True).reshape(o_ref.shape)


def simple_net_forward(x, w1, b1, w2, b2, *, target_tb=4096):
    """x: (B, 107) f32; w1: (107, 32); b1: (32,)|(1,32); w2: (32,1)|(1,32); b2 scalar-ish."""
    B = x.shape[0]
    x = jnp.asarray(x, jnp.float32)

    # Tiny resident operands (cast once; fetched once thanks to constant index_maps).
    w1_b = jnp.asarray(w1, jnp.float32).astype(jnp.bfloat16)                     # (107, 32)
    b1_r = jnp.asarray(b1, jnp.float32).reshape(1, F_HID)                        # (1, 32)
    w2_r = jnp.asarray(w2, jnp.float32).reshape(1, F_HID).astype(jnp.bfloat16)   # (1, 32)
    b2_s = jnp.asarray(b2, jnp.float32).reshape(1, 1)                            # (1, 1)

    # Batch tiling: big tiles to amortize per-grid-step overhead, chosen adaptively
    # so wasted rows stay < 8 per tile, and >=2 tiles once there is enough work so
    # v7x can shard the grid across its 2 TensorCores.
    nt = max(1, _cdiv(B, target_tb))
    if B >= 256:
        nt = max(nt, 2)
    tb = _round_up(_cdiv(B, nt), 8)
    nt = _cdiv(B, tb)

    out = pl.pallas_call(
        mlp_kernel,
        out_shape=jax.ShapeDtypeStruct((nt, 1, tb), jnp.float32),
        grid=(nt,),
        in_specs=[
            # x: streamed per batch tile straight from the caller's f32 array.
            # The last tile may be a boundary block (rows past B are unspecified
            # and get sliced off below).
            pl.BlockSpec((tb, F_IN), lambda i: (i, 0)),
            pl.BlockSpec((F_IN, F_HID), lambda i: (0, 0)),   # w1: resident
            pl.BlockSpec((1, F_HID), lambda i: (0, 0)),      # b1: resident
            pl.BlockSpec((1, F_HID), lambda i: (0, 0)),      # w2 row: resident
            pl.BlockSpec((1, 1), lambda i: (0, 0)),          # b2: resident
        ],
        # Lane-dense output: one (1, tb) row of sigmoid values per grid step.
        out_specs=pl.BlockSpec((1, 1, tb), lambda i: (i, 0, 0)),
        compiler_params=pltpu.CompilerParams(
            dimension_semantics=("parallel",),     # shard batch tiles across TCs (v7x)
            vmem_limit_bytes=32 * 1024 * 1024,     # explicit; v5e scoped default is 16 MiB
        ),
    )(x, w1_b, b1_r, w2_r, b2_s)

    return out.reshape(-1)[:B].reshape(B, 1)


def init_params(key):
    # Deterministic init mimicking nn.Linear (uniform in +/- 1/sqrt(fan_in)).
    k1, k2, k3, k4 = jax.random.split(key, 4)
    bound1 = 1.0 / jnp.sqrt(float(F_IN))
    bound2 = 1.0 / jnp.sqrt(float(F_HID))
    w1 = jax.random.uniform(k1, (F_IN, F_HID), jnp.float32, -bound1, bound1)
    b1 = jax.random.uniform(k2, (1, F_HID), jnp.float32, -bound1, bound1)
    w2 = jax.random.uniform(k3, (F_HID, 1), jnp.float32, -bound2, bound2)
    b2 = jax.random.uniform(k4, (1, 1), jnp.float32, -bound2, bound2)
    return w1, b1, w2, b2


def _reference(x, w1, b1, w2, b2):
    # Mirrors the kernel's numerics (bf16 MXU inputs, f32 accumulation / epilogue).
    xb = x.astype(jnp.bfloat16)
    w1b = jnp.asarray(w1, jnp.float32).astype(jnp.bfloat16)
    h = jnp.dot(xb, w1b, preferred_element_type=jnp.float32)
    h = jnp.maximum(h + jnp.asarray(b1, jnp.float32).reshape(1, F_HID), 0.0)
    w2b = jnp.asarray(w2, jnp.float32).reshape(F_HID, 1).astype(jnp.bfloat16)
    y = jnp.dot(h.astype(jnp.bfloat16), w2b, preferred_element_type=jnp.float32)
    y = y + jnp.asarray(b2, jnp.float32).reshape(1, 1)
    return jax.nn.sigmoid(y)


if __name__ == "__main__":
    key = jax.random.PRNGKey(0)
    kx, kp, kx2 = jax.random.split(key, 3)
    w1, b1, w2, b2 = init_params(kp)

    # Small batch (matches the module's typical use): single tile, no padding.
    batch = 8
    x = jax.random.normal(kx, (batch, F_IN), jnp.float32)
    out = jax.block_until_ready(simple_net_forward(x, w1, b1, w2, b2))
    ref = _reference(x, w1, b1, w2, b2)
    assert out.shape == (batch, 1)
    assert jnp.allclose(out, ref, atol=1e-2, rtol=1e-2), "mismatch vs reference (small batch)"

    # Larger, non-tile-aligned batch: exercises the multi-tile grid and the
    # masked boundary block on the last tile.
    batch2 = 4100
    x2 = jax.random.normal(kx2, (batch2, F_IN), jnp.float32)
    out2 = jax.block_until_ready(simple_net_forward(x2, w1, b1, w2, b2))
    ref2 = _reference(x2, w1, b1, w2, b2)
    assert out2.shape == (batch2, 1)
    assert jnp.allclose(out2, ref2, atol=1e-2, rtol=1e-2), "mismatch vs reference (large batch)"

    print("KERNEL_OK")
</pallas_src>

<mosaic_0001>
module attributes {stable_mosaic.version = 11 : i64} {
  func.func @mlp_kernel(%arg0: i32, %arg1: memref<8x107xf32, #tpu.memory_space<vmem>>, %arg2: memref<107x32xbf16, #tpu.memory_space<vmem>>, %arg3: memref<1x32xf32, #tpu.memory_space<vmem>>, %arg4: memref<1x32xbf16, #tpu.memory_space<vmem>>, %arg5: memref<1x1xf32, #tpu.memory_space<vmem>>, %arg6: memref<1x1x8xf32, #tpu.memory_space<vmem>>) attributes {dimension_semantics = [#tpu.dimension_semantics<parallel>], iteration_bounds = array<i64: 1>, scalar_prefetch = 0 : i64, scratch_operands = 0 : i64, tpu.core_type = #tpu.core_type<tc>, window_params = [{transform_indices = @transform_0, window_bounds = array<i64: 8, 107>}, {pipeline_mode = #tpu.pipeline_mode<synchronous>, transform_indices = @transform_1, window_bounds = array<i64: 107, 32>}, {pipeline_mode = #tpu.pipeline_mode<synchronous>, transform_indices = @transform_2, window_bounds = array<i64: 1, 32>}, {pipeline_mode = #tpu.pipeline_mode<synchronous>, transform_indices = @transform_3, window_bounds = array<i64: 1, 32>}, {pipeline_mode = #tpu.pipeline_mode<synchronous>, transform_indices = @transform_4, window_bounds = array<i64: 1, 1>}, {transform_indices = @transform_5, window_bounds = array<i64: 1, 1, 8>}]} {
    %c0 = arith.constant 0 : index
    %c0_0 = arith.constant 0 : index
    %0 = vector.load %arg1[%c0, %c0_0] : memref<8x107xf32, #tpu.memory_space<vmem>>, vector<8x107xf32>
    %1 = arith.truncf %0 : vector<8x107xf32> to vector<8x107xbf16>
    %c0_1 = arith.constant 0 : index
    %c0_2 = arith.constant 0 : index
    %2 = vector.load %arg2[%c0_1, %c0_2] : memref<107x32xbf16, #tpu.memory_space<vmem>>, vector<107x32xbf16>
    %cst = arith.constant dense<0.000000e+00> : vector<8x32xf32>
    %3 = tpu.matmul %1, %2, %cst {dimension_numbers = #tpu.dot_dimension_numbers<[1], [0], [0], [1], [0, 0, 1, 1], [], []>} : vector<8x107xbf16>, vector<107x32xbf16>, vector<8x32xf32> -> vector<8x32xf32>
    %c0_3 = arith.constant 0 : index
    %c0_4 = arith.constant 0 : index
    %4 = vector.load %arg3[%c0_3, %c0_4] : memref<1x32xf32, #tpu.memory_space<vmem>>, vector<1x32xf32>
    %5 = vector.broadcast %4 : vector<1x32xf32> to vector<8x32xf32>
    %6 = arith.addf %3, %5 : vector<8x32xf32>
    %cst_5 = arith.constant 0.000000e+00 : f32
    %7 = vector.broadcast %cst_5 : f32 to vector<8x32xf32>
    %8 = arith.maximumf %6, %7 : vector<8x32xf32>
    %c0_6 = arith.constant 0 : index
    %c0_7 = arith.constant 0 : index
    %9 = vector.load %arg4[%c0_6, %c0_7] : memref<1x32xbf16, #tpu.memory_space<vmem>>, vector<1x32xbf16>
    %10 = arith.truncf %8 : vector<8x32xf32> to vector<8x32xbf16>
    %cst_8 = arith.constant dense<0.000000e+00> : vector<1x8xf32>
    %11 = tpu.matmul %9, %10, %cst_8 {dimension_numbers = #tpu.dot_dimension_numbers<[1], [1], [0], [0], [0, 0, 1, 0], [], []>} : vector<1x32xbf16>, vector<8x32xbf16>, vector<1x8xf32> -> vector<1x8xf32>
    %c0_9 = arith.constant 0 : index
    %c0_10 = arith.constant 0 : index
    %12 = vector.load %arg5[%c0_9, %c0_10] : memref<1x1xf32, #tpu.memory_space<vmem>>, vector<1x1xf32>
    %13 = vector.broadcast %12 : vector<1x1xf32> to vector<1x8xf32>
    %14 = arith.addf %11, %13 : vector<1x8xf32>
    %cst_11 = arith.constant 0.000000e+00 : f32
    %15 = vector.broadcast %cst_11 : f32 to vector<1x8xf32>
    %16 = arith.subf %15, %14 : vector<1x8xf32>
    %17 = math.exp %16 : vector<1x8xf32>
    %cst_12 = arith.constant 1.000000e+00 : f32
    %18 = vector.broadcast %cst_12 : f32 to vector<1x8xf32>
    %19 = arith.addf %18, %17 : vector<1x8xf32>
    %20 = tpu.reciprocal %19 {approx = true} : vector<1x8xf32> -> vector<1x8xf32>
    %21 = vector.shape_cast %20 : vector<1x8xf32> to vector<1x1x8xf32>
    %c0_13 = arith.constant 0 : index
    %c0_14 = arith.constant 0 : index
    %c0_15 = arith.constant 0 : index
    %22 = vector.load %arg6[%c0_13, %c0_14, %c0_15] : memref<1x1x8xf32, #tpu.memory_space<vmem>>, vector<1x1x8xf32>
    tpu.vector_store %arg6[%c0_13, %c0_14, %c0_15], %21 {strides = array<i32>} : memref<1x1x8xf32, #tpu.memory_space<vmem>>, vector<1x1x8xf32>,
    return
  }
  func.func @transform_0(%arg0: i32) -> (i32, i32) {
    %c0_i32 = arith.constant 0 : i32
    %c0_i32_0 = arith.constant 0 : i32
    return %arg0, %c0_i32 : i32, i32
  }
  func.func @transform_1(%arg0: i32) -> (i32, i32) {
    %c0_i32 = arith.constant 0 : i32
    %c0_i32_0 = arith.constant 0 : i32
    %c0_i32_1 = arith.constant 0 : i32
    return %c0_i32, %c0_i32_0 : i32, i32
  }
  func.func @transform_2(%arg0: i32) -> (i32, i32) {
    %c0_i32 = arith.constant 0 : i32
    %c0_i32_0 = arith.constant 0 : i32
    %c0_i32_1 = arith.constant 0 : i32
    return %c0_i32, %c0_i32_0 : i32, i32
  }
  func.func @transform_3(%arg0: i32) -> (i32, i32) {
    %c0_i32 = arith.constant 0 : i32
    %c0_i32_0 = arith.constant 0 : i32
    %c0_i32_1 = arith.constant 0 : i32
    return %c0_i32, %c0_i32_0 : i32, i32
  }
  func.func @transform_4(%arg0: i32) -> (i32, i32) {
    %c0_i32 = arith.constant 0 : i32
    %c0_i32_0 = arith.constant 0 : i32
    %c0_i32_1 = arith.constant 0 : i32
    return %c0_i32, %c0_i32_0 : i32, i32
  }
  func.func @transform_5(%arg0: i32) -> (i32, i32, i32) {
    %c0_i32 = arith.constant 0 : i32
    %c0_i32_0 = arith.constant 0 : i32
    %c0_i32_1 = arith.constant 0 : i32
    return %arg0, %c0_i32, %c0_i32_0 : i32, i32, i32
  }
}

</mosaic_0001>

<llo_original>
// kernel: tpu_custom_call.1
$region0: #{tpu_custom_call.1}
  #allocation0 [shape = 'u32[]', space=smem, size = 0x4, offset = 0x4, fixed_abs, tag = 'smem constant byte address 0x4 - core index']
  #allocation1 [shape = 'u32[72,128]{1,0:T(1,128)}', space=vmem, size = 0x9000, scoped, tag = 'internal scratch']
  #allocation2 [shape = 'f32[1,1]{1,0:T(1,128)S(1)}', space=vmem, size = 0x200, scoped, tag = 'scoped memory for tpu_custom_call.1']
  %s0 = inlined_call_operand.vmem [shape: f32[8,107], index: 0, kind: input, shape index: {}]
  %s1 = inlined_call_operand.vmem [shape: bf16[107,32], index: 1, kind: input, shape index: {}]
  %s2 = inlined_call_operand.vmem [shape: f32[1,32], index: 2, kind: input, shape index: {}]
  %s3 = inlined_call_operand.vmem [shape: bf16[1,32], index: 3, kind: input, shape index: {}]
  %s4 = inlined_call_operand.<no memory space> [shape: f32[1,1], index: 4, kind: input, shape index: {}]
  %s5 = inlined_call_operand.hbm [shape: f32[1,1,8], index: 5, kind: output, shape index: {}]
  %s6 = sld [smem:[#allocation0]]
  $region30: #{tpu_custom_call.1} parent=0
    _
  %s8 = ssub.s32 1, %s6
  %s9 = scalar_select 0, %s8, %s6
  %v10 = vstv %s4
  %11 = vst [vmem:[#allocation2] sm:$0x1] %v10
  $region1: #{tpu_custom_call.1} parent=0
    #allocation3 [shape = 'u8[512]{0}', space=vmem, size = 0x400, scoped, tag = 'output window, operand 0, single buffered']
    #allocation4 [shape = 's32[1]{0}', space=sflag, size = 0x4, scoped, tag = 'scoped memory for tpu_custom_call.1']
    %12 = vsyncpa [#allocation4], 0
    // Predicated region
    $region2: #{tpu_custom_call.1} parent=1 // pred_check
      _
    $region3: #{tpu_custom_call.1} parent=1 // pred_check_branch
      %14 = sbr.rel (0) target = $region5
    $region4: #{tpu_custom_call.1} parent=1 // pred_region
      _
    $region5: #{tpu_custom_call.1} parent=1 // pred_fallthru
      _
    // Predicated region
    $region6: #{tpu_custom_call.1} parent=1 // pred_check
      _
    $region7: #{tpu_custom_call.1} parent=1 // pred_check_branch
      %16 = sbr.rel (0) target = $region9
    $region8: #{tpu_custom_call.1} parent=1 // pred_region
      _
    $region9: #{tpu_custom_call.1} parent=1 // pred_fallthru
      _
    // Predicated region
    $region10: #{tpu_custom_call.1} parent=1 // pred_check
      _
    $region11: #{tpu_custom_call.1} parent=1 // pred_check_branch
      %18 = sbr.rel (0) target = $region13
    $region12: #{tpu_custom_call.1} parent=1 // pred_region
      _
    $region13: #{tpu_custom_call.1} parent=1 // pred_fallthru
      _
    // Predicated region
    $region14: #{tpu_custom_call.1} parent=1 // pred_check
      _
    $region15: #{tpu_custom_call.1} parent=1 // pred_check_branch
      %20 = sbr.rel (0) target = $region17
    $region16: #{tpu_custom_call.1} parent=1 // pred_region
      _
    $region17: #{tpu_custom_call.1} parent=1 // pred_fallthru
      _
    // Predicated region
    $region18: #{tpu_custom_call.1} parent=1 // pred_check
      _
    $region19: #{tpu_custom_call.1} parent=1 // pred_check_branch
      %22 = sbr.rel (0) target = $region21
    $region20: #{tpu_custom_call.1} parent=1 // pred_region
      _
    $region21: #{tpu_custom_call.1} parent=1 // pred_fallthru
      _
    %v24 = vld [vmem:[%s0] sm:$0xff]
    %v25 = vpack.c.bf16 %v24, %v24
    %v26 = vld [vmem:[%s1] sm:$0xf]
    %v27 = vld [vmem:[%s1 + $0x4] sm:$0xf]
    %v28 = vld [vmem:[%s1 + $0x8] sm:$0xf]
    %v29 = vld [vmem:[%s1 + $0xc] sm:$0xf]
    %v30 = vld [vmem:[%s1 + $0x10] sm:$0xf]
    %v31 = vld [vmem:[%s1 + $0x14] sm:$0xf]
    %v32 = vld [vmem:[%s1 + $0x18] sm:$0xf]
    %v33 = vld [vmem:[%s1 + $0x1c] sm:$0xf]
    %v34 = vld [vmem:[%s1 + $0x20] sm:$0xf]
    %v35 = vld [vmem:[%s1 + $0x24] sm:$0xf]
    %v36 = vld [vmem:[%s1 + $0x28] sm:$0xf]
    %v37 = vld [vmem:[%s1 + $0x2c] sm:$0xf]
    %v38 = vld [vmem:[%s1 + $0x30] sm:$0xf]
    %v39 = vld [vmem:[%s1 + $0x34] sm:$0x3]
    %v40 = vld [vmem:[%s2] sm:$0x1]
    %v42 = vperm.slane %v40, 0
    %v58 = vunpack.c.l.b16 %v26
    %v59 = vunpack.c.l.b16 %v27
    %v60 = vunpack.c.l.b16 %v28
    %v61 = vunpack.c.l.b16 %v29
    %v62 = vunpack.c.l.b16 %v30
    %v63 = vunpack.c.l.b16 %v31
    %v64 = vunpack.c.l.b16 %v32
    %v65 = vunpack.c.l.b16 %v33
    %v66 = vunpack.c.l.b16 %v34
    %v67 = vunpack.c.l.b16 %v35
    %v68 = vunpack.c.l.b16 %v36
    %v69 = vunpack.c.l.b16 %v37
    %v70 = vunpack.c.l.b16 %v38
    %v71 = vunpack.c.l.b16 %v39
    %v72 = vpack.c.b16 %v59, %v58
    %v73 = vpack.c.b16 %v61, %v60
    %v74 = vpack.c.b16 %v63, %v62
    %v75 = vpack.c.b16 %v65, %v64
    %v76 = vpack.c.b16 %v67, %v66
    %v77 = vpack.c.b16 %v69, %v68
    %v78 = vpack.c.b16 %v71, %v70
    %vm85 = vcmask 875520
    %v87 = vsel %vm85, %v25, 0
    %vm89 = vcmask 1044480
    %vm90 = vcmask 1045504
    %v91 = vsel %vm89, 4294967295, 65535
    %v92 = vsel %vm90, %v91, 0
    %v94 = vand.u32 %v78, %v92
    %96 = vmatpush.bf16.msra.mxu0 0
    %97 = vmatpush.bf16.msra.mxu0 %v94
    %98 = vmatpush.bf16.msra.mxu0 %v77
    %99 = vmatpush.bf16.msra.mxu0 %v76
    %100 = vmatpush.bf16.msra.mxu0 %v75
    %101 = vmatpush.bf16.msra.mxu0 %v74
    %102 = vmatpush.bf16.msra.mxu0 %v73
    %103 = vmatpush.bf16.msra.mxu0 %v72
    %104 = vmatmul.bf16.gmra.mxu0 %v87
    %v105 = vpop.f32.mrf.mxu0
    %v106 = vadd.f32 %v42, %v105
    %v107 = vpop.f32.mrf.mxu0
    %108 = vdwg.mxu0
    %v109 = vmax.f32 %v106, 0.0
    %v110 = vld [vmem:[%s3] sm:$0x1]
    %v111 = vpack.c.bf16 %v109, %v109
    %v112 = vld [vmem:[#allocation2] sm:$0x1]
    %114 = vset.pattern.permute.xlu0 0
    %115 = vperm.xlu0 %114, %v112
    %v116 = vpop.permute.xlu0 %115
    %v118 = vperm.slane %v116, 0
    %vm119 = vcmask 261120
    %v121 = vsel %vm119, %v110, 0
    %v124 = vsel %vm119, %v111, 0
    %126 = vmatpush.bf16.xpose.msra.mxu0 0
    %127 = vmatpush.bf16.xpose.msra.mxu0 0
    %128 = vmatpush.bf16.xpose.msra.mxu0 0
    %129 = vmatpush.bf16.xpose.msra.mxu0 0
    %130 = vmatpush.bf16.xpose.msra.mxu0 0
    %131 = vmatpush.bf16.xpose.msra.mxu0 0
    %132 = vmatpush.bf16.xpose.msra.mxu0 0
    %133 = vmatpush.bf16.xpose.msra.mxu0 %v124
    %134 = vmatmul.bf16.gmra.mxu0 %v121
    %v135 = vpop.f32.mrf.mxu0
    %v136 = vadd.f32 %v118, %v135
    %v137 = vpop.f32.mrf.mxu0
    %138 = vdwg.mxu0
    %v139 = vsub.f32 0.0, %v136
    %v140 = vmul.f32 %v139, 1.442695
    %v141 = vpow.pop %v140
    %v142 = vadd.f32 %v141, 1.0
    %v143 = vrcp.pop %v142
    %vm144 = vcmask 57344
    %145 = vst.msk [vmem:[#allocation3] sm:$0x1] %vm144, %v143
    // Predicated region
    $region22: #{tpu_custom_call.1} parent=1 // pred_check
      _
    $region23: #{tpu_custom_call.1} parent=1 // pred_check_branch
      %147 = sbr.rel (0) target = $region25
    $region24: #{tpu_custom_call.1} parent=1 // pred_region
      %149 = vsyncadd [#allocation4], 0
      %s151 = sshll.u32 [#allocation3], 4
      %s152 = int_to_ptr.vmem [resolvable:$true] %s151
      %s153 = sshll.u32 %s5, 4
      %s154 = int_to_ptr.hbm [resolvable:$true] %s153
      %156 = dma.vmem_to_hbm [thread:$0]  %s152, 16, %s154, [#allocation4]
    $region25: #{tpu_custom_call.1} parent=1 // pred_fallthru
      _
    // Predicated region
    $region26: #{tpu_custom_call.1} parent=1 // pred_check
      _
    $region27: #{tpu_custom_call.1} parent=1 // pred_check_branch
      %158 = sbr.rel (0) target = $region29
    $region28: #{tpu_custom_call.1} parent=1 // pred_region
      %160 = dma.done [#allocation4], 16
    $region29: #{tpu_custom_call.1} parent=1 // pred_fallthru
      _
    %161 = vsyncpa [#allocation4], 1

</llo_original>
